<compile_context>
chip_gen: v6e
topology: v6e:2x2x1
jax: 0.10.0
libtpu: 0.0.40
codegen_flags: <defaults>
</compile_context>

<pallas_src>
import functools

import jax
import jax.numpy as jnp
from jax.experimental import pallas as pl
from jax.experimental.pallas import tpu as pltpu


# ----------------------------- kernels --------------------------------------


def _kernel_1k_bias(x_ref, w_ref, b_ref, o_ref):
    acc = jnp.dot(
        x_ref[...].astype(w_ref.dtype), w_ref[...],
        preferred_element_type=jnp.float32,
    )
    o_ref[...] = (acc + b_ref[...].astype(jnp.float32)).astype(o_ref.dtype)


def _kernel_1k_nobias(x_ref, w_ref, o_ref):
    acc = jnp.dot(
        x_ref[...].astype(w_ref.dtype), w_ref[...],
        preferred_element_type=jnp.float32,
    )
    o_ref[...] = acc.astype(o_ref.dtype)


def _kernel_mk_bias(x_ref, w_ref, b_ref, o_ref, acc_ref):
    k = pl.program_id(2)

    @pl.when(k == 0)
    def _init():
        acc_ref[...] = jnp.zeros_like(acc_ref)

    acc_ref[...] += jnp.dot(
        x_ref[...].astype(w_ref.dtype), w_ref[...],
        preferred_element_type=jnp.float32,
    )

    @pl.when(k == pl.num_programs(2) - 1)
    def _finalize():
        o_ref[...] = (acc_ref[...] + b_ref[...].astype(jnp.float32)).astype(
            o_ref.dtype
        )


def _kernel_mk_nobias(x_ref, w_ref, o_ref, acc_ref):
    k = pl.program_id(2)

    @pl.when(k == 0)
    def _init():
        acc_ref[...] = jnp.zeros_like(acc_ref)

    acc_ref[...] += jnp.dot(
        x_ref[...].astype(w_ref.dtype), w_ref[...],
        preferred_element_type=jnp.float32,
    )

    @pl.when(k == pl.num_programs(2) - 1)
    def _finalize():
        o_ref[...] = acc_ref[...].astype(o_ref.dtype)


# ----------------------------- helpers --------------------------------------


def _round_up(x, m):
    return ((x + m - 1) // m) * m


def _pick_tile_m(bp):
    for c in (512, 256, 128, 64, 32, 16, 8):
        if bp % c == 0:
            return c
    return bp  # bp is always a multiple of 8, so this is unreachable


def _pick_tile_n(out_p):
    for c in (1024, 512, 256, 128):
        if out_p % c == 0:
            return c
    return out_p  # out_p is always a multiple of 128


def _pick_tile_k(in_p):
    if in_p <= 1024:
        return in_p  # full-extent K tile is always layout-legal
    for c in (1024, 512, 256, 128):
        if in_p % c == 0:
            return c
    return in_p


def _vmem_capacity_bytes():
    try:
        cap = int(pltpu.get_tpu_info().vmem_capacity_bytes)
        if cap > 0:
            return cap
    except Exception:
        pass
    return 64 << 20  # conservative: v7x per-TensorCore VMEM


def _make_weight_spec(tk, tn, index_map, buffers):
    buffered = getattr(pl, "Buffered", None)
    if buffers > 2 and buffered is not None:
        try:
            return pl.BlockSpec((tk, tn), index_map,
                                pipeline_mode=buffered(buffers))
        except TypeError:
            pass
    return pl.BlockSpec((tk, tn), index_map)


# ------------------------ parameter preparation ------------------------------


def prepare_linear_params(weight, bias=None, *, param_dtype=None):
    """Prepare torch-layout Linear params ONCE (not in the per-call hot path).

    weight: [Out, In] (torch layout); bias: [Out] or None.
    param_dtype: e.g. jnp.bfloat16 to halve weight HBM traffic (f32 accumulate
    is kept inside the kernel).
    """
    out_f, in_f = weight.shape
    if param_dtype is None:
        param_dtype = weight.dtype
    weight_t = jnp.asarray(weight.T, dtype=param_dtype)  # [In, Out]

    # Lane-dense output: pad Out to a multiple of 128 (unmasked vst).
    out_p = _round_up(out_f, 128)
    # Pad In only when it is large and would not tile cleanly; for In <= 1024
    # a full-extent K tile is legal and avoids any per-call padding of x.
    in_p = in_f if in_f <= 1024 else _round_up(in_f, 128)
    if in_p != in_f or out_p != out_f:
        weight_t = jnp.pad(weight_t, ((0, in_p - in_f), (0, out_p - out_f)))

    b2d = None
    if bias is not None:
        b = jnp.asarray(bias, dtype=jnp.float32)
        if out_p != out_f:
            b = jnp.pad(b, (0, out_p - out_f))
        b2d = b.reshape(1, out_p)

    return dict(weight_t=weight_t, bias=b2d,
                in_features=in_f, out_features=out_f,
                in_padded=in_p, out_padded=out_p)


# ------------------------------- forward -------------------------------------


def linear_pallas(x, params):
    """y = x @ W.T + b with prepared params (torch.nn.Linear semantics)."""
    in_f, out_f = params["in_features"], params["out_features"]
    in_p, out_p = params["in_padded"], params["out_padded"]
    weight_t, b2d = params["weight_t"], params["bias"]
    has_bias = b2d is not None

    b_dim = x.shape[0]
    assert x.shape[1] == in_f, "x last dim must equal in_features"

    # TODO(synk): for grid == (1, 1) tiny shapes a plain jnp.dot avoids the
    # kernel launch overhead; kept on the Pallas path here so the kernel runs.

    # Pad batch / K only when needed (no-op for aligned callers). Prefer
    # aligning shapes at the caller to keep this out of the hot path entirely.
    bp = _round_up(b_dim, 128) if b_dim > 128 else _round_up(b_dim, 8)
    pad_m, pad_k = bp - b_dim, in_p - in_f
    if pad_m or pad_k:
        x = jnp.pad(x, ((0, pad_m), (0, pad_k)))

    tm = _pick_tile_m(bp)
    tn = _pick_tile_n(out_p)
    tk = _pick_tile_k(in_p)
    gm, gn, gk = bp // tm, out_p // tn, in_p // tk

    # v7x has 2 TensorCores: make sure at least one parallel axis has >=2 tiles.
    if gm == 1 and gn == 1:
        if tn >= 256:
            tn //= 2
            gn = 2
        elif tm >= 16:
            tm //= 2
            gm = 2

    multi_k = gk > 1
    x_item = jnp.dtype(x.dtype).itemsize
    w_item = jnp.dtype(weight_t.dtype).itemsize
    o_item = x_item
    w_bufs = 3 if multi_k else 2

    vmem_needed = (
        2 * tm * tk * x_item
        + w_bufs * tk * tn * w_item
        + 2 * tm * tn * o_item
        + (tm * tn * 4 if multi_k else 0)
        + (2 * 8 * tn * 4 if has_bias else 0)  # (1,tn) bias pads to 8 sublanes
    )
    cap = _vmem_capacity_bytes()
    vmem_limit = max(32 << 20, int(1.25 * vmem_needed))
    vmem_limit = min(vmem_limit, int(0.75 * cap))
    vmem_limit = max(vmem_limit, vmem_needed)

    cost = pl.CostEstimate(
        flops=2 * bp * in_p * out_p,
        transcendentals=0,
        bytes_accessed=int(
            gn * bp * in_p * x_item          # x re-streamed once per N block
            + gm * in_p * out_p * w_item     # weight re-streamed once per M block
            + bp * out_p * o_item
            + (gm * out_p * 4 if has_bias else 0)
        ),
    )

    if multi_k:
        grid = (gm, gn, gk)
        dims = ("parallel", "parallel", "arbitrary")
        x_spec = pl.BlockSpec((tm, tk), lambda i, j, k: (i, k))
        w_spec = _make_weight_spec(tk, tn, lambda i, j, k: (k, j), buffers=3)
        b_spec = pl.BlockSpec((1, tn), lambda i, j, k: (0, j))
        o_spec = pl.BlockSpec((tm, tn), lambda i, j, k: (i, j))
        scratch = (pltpu.VMEM((tm, tn), jnp.float32),)
        kernel = _kernel_mk_bias if has_bias else _kernel_mk_nobias
    else:
        grid = (gm, gn)
        dims = ("parallel", "parallel")
        x_spec = pl.BlockSpec((tm, tk), lambda i, j: (i, 0))
        w_spec = pl.BlockSpec((tk, tn), lambda i, j: (0, j))
        b_spec = pl.BlockSpec((1, tn), lambda i, j: (0, j))
        o_spec = pl.BlockSpec((tm, tn), lambda i, j: (i, j))
        scratch = ()
        kernel = _kernel_1k_bias if has_bias else _kernel_1k_nobias

    in_specs = [x_spec, w_spec] + ([b_spec] if has_bias else [])
    operands = (x, weight_t) + ((b2d,) if has_bias else ())

    out = pl.pallas_call(
        kernel,
        out_shape=jax.ShapeDtypeStruct((bp, out_p), x.dtype),
        grid=grid,
        in_specs=in_specs,
        out_specs=o_spec,
        scratch_shapes=scratch,
        compiler_params=pltpu.CompilerParams(
            dimension_semantics=dims,
            vmem_limit_bytes=int(vmem_limit),
        ),
        cost_estimate=cost,
    )(*operands)

    if bp != b_dim or out_p != out_f:
        out = out[:b_dim, :out_f]
    return out


# --------------------------------- main ---------------------------------------


if __name__ == "__main__":
    key = jax.random.PRNGKey(0)
    kx, kw, kb, kx2, kw2 = jax.random.split(key, 5)

    # ---- Case 1: module-sized shapes (single-K fast path, bias=True) --------
    batch, in_features, out_features = 8, 32, 128
    x = jax.random.normal(kx, (batch, in_features), dtype=jnp.float32)
    bound = 1.0 / (in_features ** 0.5)
    weight = jax.random.uniform(
        kw, (out_features, in_features), jnp.float32, -bound, bound)
    bias = jax.random.uniform(kb, (out_features,), jnp.float32, -bound, bound)
    y_ref = x @ weight.T + bias

    params_f32 = prepare_linear_params(weight, bias)          # exact semantics
    y = jax.block_until_ready(linear_pallas(x, params_f32))
    assert y.shape == (batch, out_features)
    assert jnp.allclose(y, y_ref, atol=1e-5, rtol=1e-5), "f32 mismatch"

    # bf16-stored weights (mem-bound win), f32 accumulation — looser tolerance.
    params_bf16 = prepare_linear_params(weight, bias, param_dtype=jnp.bfloat16)
    y_bf16 = jax.block_until_ready(linear_pallas(x, params_bf16))
    assert jnp.allclose(y_bf16, y_ref, atol=5e-2, rtol=5e-2), "bf16 mismatch"

    # ---- Case 2: multi-K accumulator path, padded Out, bias=False -----------
    b2, in2, out2 = 16, 2048, 192
    x2 = jax.random.normal(kx2, (b2, in2), dtype=jnp.float32)
    bound2 = 1.0 / (in2 ** 0.5)
    w2 = jax.random.uniform(kw2, (out2, in2), jnp.float32, -bound2, bound2)
    y2_ref = x2 @ w2.T

    params2 = prepare_linear_params(w2, None)                 # bias=False
    y2 = jax.block_until_ready(linear_pallas(x2, params2))
    assert y2.shape == (b2, out2)
    assert jnp.allclose(y2, y2_ref, atol=1e-4, rtol=1e-4), "multi-K mismatch"

    print("KERNEL_OK")
</pallas_src>

<mosaic_0001>
module attributes {stable_mosaic.version = 11 : i64} {
  func.func @_kernel_1k_bias(%arg0: i32, %arg1: i32, %arg2: memref<8x32xf32, #tpu.memory_space<vmem>>, %arg3: memref<32x128xf32, #tpu.memory_space<vmem>>, %arg4: memref<1x128xf32, #tpu.memory_space<vmem>>, %arg5: memref<8x128xf32, #tpu.memory_space<vmem>>) attributes {dimension_semantics = [#tpu.dimension_semantics<parallel>, #tpu.dimension_semantics<parallel>], iteration_bounds = array<i64: 1, 1>, scalar_prefetch = 0 : i64, scratch_operands = 0 : i64, tpu.core_type = #tpu.core_type<tc>, window_params = [{transform_indices = @transform_0, window_bounds = array<i64: 8, 32>}, {transform_indices = @transform_1, window_bounds = array<i64: 32, 128>}, {transform_indices = @transform_2, window_bounds = array<i64: 1, 128>}, {transform_indices = @transform_3, window_bounds = array<i64: 8, 128>}]} {
    %c0 = arith.constant 0 : index
    %c0_0 = arith.constant 0 : index
    %0 = vector.load %arg2[%c0, %c0_0] : memref<8x32xf32, #tpu.memory_space<vmem>>, vector<8x32xf32>
    %c0_1 = arith.constant 0 : index
    %c0_2 = arith.constant 0 : index
    %1 = vector.load %arg3[%c0_1, %c0_2] : memref<32x128xf32, #tpu.memory_space<vmem>>, vector<32x128xf32>
    %cst = arith.constant dense<0.000000e+00> : vector<8x128xf32>
    %2 = tpu.matmul %0, %1, %cst {dimension_numbers = #tpu.dot_dimension_numbers<[1], [0], [0], [1], [0, 0, 1, 1], [], []>} : vector<8x32xf32>, vector<32x128xf32>, vector<8x128xf32> -> vector<8x128xf32>
    %c0_3 = arith.constant 0 : index
    %c0_4 = arith.constant 0 : index
    %3 = vector.load %arg4[%c0_3, %c0_4] : memref<1x128xf32, #tpu.memory_space<vmem>>, vector<1x128xf32>
    %4 = vector.broadcast %3 : vector<1x128xf32> to vector<8x128xf32>
    %5 = arith.addf %2, %4 : vector<8x128xf32>
    %c0_5 = arith.constant 0 : index
    %c0_6 = arith.constant 0 : index
    %6 = vector.load %arg5[%c0_5, %c0_6] : memref<8x128xf32, #tpu.memory_space<vmem>>, vector<8x128xf32>
    tpu.vector_store %arg5[%c0_5, %c0_6], %5 {strides = array<i32>} : memref<8x128xf32, #tpu.memory_space<vmem>>, vector<8x128xf32>,
    return
  }
  func.func @transform_0(%arg0: i32, %arg1: i32) -> (i32, i32) {
    %c0_i32 = arith.constant 0 : i32
    %c0_i32_0 = arith.constant 0 : i32
    return %arg0, %c0_i32 : i32, i32
  }
  func.func @transform_1(%arg0: i32, %arg1: i32) -> (i32, i32) {
    %c0_i32 = arith.constant 0 : i32
    %c0_i32_0 = arith.constant 0 : i32
    return %c0_i32, %arg1 : i32, i32
  }
  func.func @transform_2(%arg0: i32, %arg1: i32) -> (i32, i32) {
    %c0_i32 = arith.constant 0 : i32
    %c0_i32_0 = arith.constant 0 : i32
    return %c0_i32, %arg1 : i32, i32
  }
  func.func @transform_3(%arg0: i32, %arg1: i32) -> (i32, i32) {
    %c0_i32 = arith.constant 0 : i32
    return %arg0, %arg1 : i32, i32
  }
}

</mosaic_0001>

<llo_original>
// kernel: tpu_custom_call.1
$region0: #{tpu_custom_call.1}
  #allocation0 [shape = 'u32[]', space=smem, size = 0x4, offset = 0x4, fixed_abs, tag = 'smem constant byte address 0x4 - core index']
  #allocation1 [shape = 'u32[144,128]{1,0:T(1,128)}', space=vmem, size = 0x12000, scoped, tag = 'internal scratch']
  %s0 = inlined_call_operand.hbm [shape: f32[8,32], index: 0, kind: input, shape index: {}]
  %s1 = inlined_call_operand.hbm [shape: f32[32,128], index: 1, kind: input, shape index: {}]
  %s2 = inlined_call_operand.vmem [shape: f32[1,128], index: 2, kind: input, shape index: {}]
  %s3 = inlined_call_operand.hbm [shape: f32[8,128], index: 3, kind: output, shape index: {}]
  %s4 = sld [smem:[#allocation0]]
  $region30: #{tpu_custom_call.1} parent=0
    _
  %s6 = ssub.s32 1, %s4
  %s7 = scalar_select 0, %s6, %s4
  $region1: #{tpu_custom_call.1} parent=0
    #allocation2 [shape = 'u8[4096]{0}', space=vmem, size = 0x1000, scoped, tag = 'input window, operand 0, single buffered']
    #allocation3 [shape = 's32[1]{0}', space=sflag, size = 0x4, scoped, tag = 'scoped memory for tpu_custom_call.1']
    #allocation4 [shape = 's32[1]{0}', space=sflag, size = 0x4, scoped, tag = 'scoped memory for tpu_custom_call.1']
    #allocation5 [shape = 'u8[16384]{0}', space=vmem, size = 0x4000, scoped, tag = 'input window, operand 1, single buffered']
    #allocation6 [shape = 's32[1]{0}', space=sflag, size = 0x4, scoped, tag = 'scoped memory for tpu_custom_call.1']
    #allocation7 [shape = 'u8[4096]{0}', space=vmem, size = 0x1000, scoped, tag = 'output window, operand 0, single buffered']
    %8 = vsyncpa [#allocation3], 0
    %9 = vsyncpa [#allocation6], 0
    %10 = vsyncpa [#allocation4], 0
    // Predicated region
    $region2: #{tpu_custom_call.1} parent=1 // pred_check
      _
    $region3: #{tpu_custom_call.1} parent=1 // pred_check_branch
      %12 = sbr.rel (0) target = $region5
    $region4: #{tpu_custom_call.1} parent=1 // pred_region
      %s14 = ssub.s32 128, 128
      %15 = vsyncadd [#allocation3], %s14
      %s17 = sshll.u32 [#allocation2], 4
      %s18 = int_to_ptr.vmem [resolvable:$true] %s17
      %20 = dma.hbm_to_vmem [thread:$0]  %s0, 128, %s18, [#allocation3]
    $region5: #{tpu_custom_call.1} parent=1 // pred_fallthru
      _
    // Predicated region
    $region6: #{tpu_custom_call.1} parent=1 // pred_check
      _
    $region7: #{tpu_custom_call.1} parent=1 // pred_check_branch
      %22 = sbr.rel (0) target = $region9
    $region8: #{tpu_custom_call.1} parent=1 // pred_region
      %s24 = ssub.s32 512, 512
      %25 = vsyncadd [#allocation6], %s24
      %s26 = sshll.u32 [#allocation5], 4
      %s27 = int_to_ptr.vmem [resolvable:$true] %s26
      %32 = dma.hbm_to_vmem [thread:$0]  %s1, 512, %s27, [#allocation6], 128, 128, 8
    $region9: #{tpu_custom_call.1} parent=1 // pred_fallthru
      _
    // Predicated region
    $region10: #{tpu_custom_call.1} parent=1 // pred_check
      _
    $region11: #{tpu_custom_call.1} parent=1 // pred_check_branch
      %34 = sbr.rel (0) target = $region13
    $region12: #{tpu_custom_call.1} parent=1 // pred_region
      _
    $region13: #{tpu_custom_call.1} parent=1 // pred_fallthru
      _
    // Predicated region
    $region14: #{tpu_custom_call.1} parent=1 // pred_check
      _
    $region15: #{tpu_custom_call.1} parent=1 // pred_check_branch
      %36 = sbr.rel (0) target = $region17
    $region16: #{tpu_custom_call.1} parent=1 // pred_region
      %37 = dma.done [#allocation3], 128
    $region17: #{tpu_custom_call.1} parent=1 // pred_fallthru
      _
    // Predicated region
    $region18: #{tpu_custom_call.1} parent=1 // pred_check
      _
    $region19: #{tpu_custom_call.1} parent=1 // pred_check_branch
      %39 = sbr.rel (0) target = $region21
    $region20: #{tpu_custom_call.1} parent=1 // pred_region
      %40 = dma.done [#allocation6], 512
    $region21: #{tpu_custom_call.1} parent=1 // pred_fallthru
      _
    %v41 = vld [vmem:[#allocation2] sm:$0xff]
    %v42 = vld [vmem:[#allocation5] sm:$0xff]
    %v43 = vld [vmem:[#allocation5 + $0x8] sm:$0xff]
    %v44 = vld [vmem:[#allocation5 + $0x10] sm:$0xff]
    %v45 = vld [vmem:[#allocation5 + $0x18] sm:$0xff]
    %v46 = vld [vmem:[%s2] sm:$0x1]
    %v48 = vlaneseq
    %v49 = vshrl.u32 %v48, 7
    %v50 = vsub.s32 0, %v49
    %v51 = vrot.slane %v46, %v50
    %vm53 = vcmask 261120
    %v55 = vsel %vm53, %v41, 0
    %57 = vmatprep.subr.mxu0 0.0
    %58 = vmatpush1.msra.mxu0 0.0
    %59 = vmatprep.subr.mxu0 0.0
    %60 = vmatpush1.msra.mxu0 0.0
    %61 = vmatprep.subr.mxu0 0.0
    %62 = vmatpush1.msra.mxu0 0.0
    %63 = vmatprep.subr.mxu0 0.0
    %64 = vmatpush1.msra.mxu0 0.0
    %65 = vmatprep.subr.mxu0 0.0
    %66 = vmatpush1.msra.mxu0 0.0
    %67 = vmatprep.subr.mxu0 0.0
    %68 = vmatpush1.msra.mxu0 0.0
    %69 = vmatprep.subr.mxu0 0.0
    %70 = vmatpush1.msra.mxu0 0.0
    %71 = vmatprep.subr.mxu0 0.0
    %72 = vmatpush1.msra.mxu0 0.0
    %73 = vmatprep.subr.mxu0 0.0
    %74 = vmatpush1.msra.mxu0 0.0
    %75 = vmatprep.subr.mxu0 0.0
    %76 = vmatpush1.msra.mxu0 0.0
    %77 = vmatprep.subr.mxu0 0.0
    %78 = vmatpush1.msra.mxu0 0.0
    %79 = vmatprep.subr.mxu0 0.0
    %80 = vmatpush1.msra.mxu0 0.0
    %81 = vmatprep.subr.mxu0 0.0
    %82 = vmatpush1.msra.mxu0 %v45
    %83 = vmatprep.subr.mxu0 0.0
    %84 = vmatpush1.msra.mxu0 %v44
    %85 = vmatprep.subr.mxu0 0.0
    %86 = vmatpush1.msra.mxu0 %v43
    %87 = vmatprep.subr.mxu0 0.0
    %88 = vmatpush1.msra.mxu0 %v42
    %89 = vmatprep.subr.mxu0 0.0
    %90 = vmatpush2.msra.mxu0 0.0
    %91 = vmatprep.subr.mxu0 0.0
    %92 = vmatpush2.msra.mxu0 0.0
    %93 = vmatprep.subr.mxu0 0.0
    %94 = vmatpush2.msra.mxu0 0.0
    %95 = vmatprep.subr.mxu0 0.0
    %96 = vmatpush2.msra.mxu0 0.0
    %97 = vmatprep.subr.mxu0 0.0
    %98 = vmatpush2.msra.mxu0 0.0
    %99 = vmatprep.subr.mxu0 0.0
    %100 = vmatpush2.msra.mxu0 0.0
    %101 = vmatprep.subr.mxu0 0.0
    %102 = vmatpush2.msra.mxu0 0.0
    %103 = vmatprep.subr.mxu0 0.0
    %104 = vmatpush2.msra.mxu0 0.0
    %105 = vmatprep.subr.mxu0 0.0
    %106 = vmatpush2.msra.mxu0 0.0
    %107 = vmatprep.subr.mxu0 0.0
    %108 = vmatpush2.msra.mxu0 0.0
    %109 = vmatprep.subr.mxu0 0.0
    %110 = vmatpush2.msra.mxu0 0.0
    %111 = vmatprep.subr.mxu0 0.0
    %112 = vmatpush2.msra.mxu0 0.0
    %113 = vmatprep.subr.mxu0 0.0
    %114 = vmatpush2.msra.mxu0 0.0
    %115 = vmatprep.subr.mxu0 0.0
    %116 = vmatpush2.msra.mxu0 0.0
    %117 = vmatprep.subr.mxu0 0.0
    %118 = vmatpush2.msra.mxu0 0.0
    %119 = vmatprep.subr.mxu0 0.0
    %120 = vmatpush2.msra.mxu0 0.0
    %121 = vmatprep.mubr.f32.mxu0 0.0
    %122 = vmatmul.mubr.f32.gmra.mxu0 %v55
    %v123 = vpop.f32.mrf.mxu0
    %v124 = vadd.f32 %v51, %v123
    %v125 = vpop.f32.mrf.mxu0
    %126 = vdwg.mxu0
    %127 = vst [vmem:[#allocation7] sm:$0xff] %v124
    // Predicated region
    $region22: #{tpu_custom_call.1} parent=1 // pred_check
      _
    $region23: #{tpu_custom_call.1} parent=1 // pred_check_branch
      %129 = sbr.rel (0) target = $region25
    $region24: #{tpu_custom_call.1} parent=1 // pred_region
      %s131 = ssub.s32 128, 128
      %132 = vsyncadd [#allocation4], %s131
      %s134 = sshll.u32 [#allocation7], 4
      %s135 = int_to_ptr.vmem [resolvable:$true] %s134
      %137 = dma.vmem_to_hbm [thread:$0]  %s135, 128, %s3, [#allocation4]
    $region25: #{tpu_custom_call.1} parent=1 // pred_fallthru
      _
    // Predicated region
    $region26: #{tpu_custom_call.1} parent=1 // pred_check
      _
    $region27: #{tpu_custom_call.1} parent=1 // pred_check_branch
      %139 = sbr.rel (0) target = $region29
    $region28: #{tpu_custom_call.1} parent=1 // pred_region
      %140 = dma.done [#allocation4], 128
    $region29: #{tpu_custom_call.1} parent=1 // pred_fallthru
      _
    %141 = vsyncpa [#allocation3], 1
    %142 = vsyncpa [#allocation6], 1
    %143 = vsyncpa [#allocation4], 1

</llo_original>
